<compile_context>
chip_gen: v5e
topology: v5e:2x2
jax: 0.10.0
libtpu: 0.0.40
codegen_flags: <defaults>
</compile_context>

<pallas_src>
import functools

import jax
import jax.numpy as jnp
from jax import lax
from jax.experimental import pallas as pl
from jax.experimental.pallas import tpu as pltpu

LANE = 128  # vreg lane width


def _round_up(n, m):
    return ((n + m - 1) // m) * m


def moe_kernel(x_ref, w_ref, b_ref, out_ref, *, gh_pad, e_pad, num_experts):
    x = x_ref[...]                                                        # [tb, D]

    # ---- ONE wide, lane-dense matmul: columns [0, gh_pad) are the folded expert
    # weights, columns [gh_pad, gh_pad + e_pad) are the (padded) gate weights. ----
    y = jnp.dot(x, w_ref[...], preferred_element_type=jnp.float32) + b_ref[...]

    # 128-aligned static slices are free (no cross-lane shuffles).
    expert_all = y[:, :gh_pad]                                            # [tb, gh_pad]
    logits = y[:, gh_pad:]                                                # [tb, e_pad]

    # ---- gate: only the row-sum of the softmax is consumed (== 1.0 analytically),
    # so skip the [tb, E] softmax multiply and second lane reduction entirely. ----
    col = lax.broadcasted_iota(jnp.int32, logits.shape, 1)
    masked = jnp.where(col < num_experts, logits, -1e30)                  # ignore pad lanes
    m = jnp.max(masked, axis=1, keepdims=True)
    s = jnp.sum(jnp.exp(masked - m), axis=1, keepdims=True)               # softmax denom
    # approx=False -> f32-exact (s * 1/s within 1 ulp of 1.0); approx=True would use the
    # free EUP slot at ~1e-3 relative error in this unit factor.
    gate_sum = s * pl.reciprocal(s, approx=False)                         # [tb, 1]

    # Single full-width (lane-dense) store.
    out_ref[...] = (gate_sum * expert_all).astype(out_ref.dtype)


def prepare_fused_params(wg, bg, we, be, *, num_groups, experts_per_group,
                         hidden_size, mxu_dtype=jnp.float32):
    """One-time weight preparation (hoisted out of the per-call hot path).

    Linearity fold:  sum_k (x @ W_{g,k} + b_{g,k}) == x @ (sum_k W_{g,k}) + sum_k b_{g,k}.
    Then pad the expert block (GH cols) and gate block (E cols) to full 128-lane tiles and
    concatenate so the kernel issues a single lane-dense matmul.

    wg: [D, E]; bg: [1, E]; we: [NE, D, H]; be: [NE, H], expert idx = g*experts_per_group+k.
    """
    D = wg.shape[0]
    G, Kpg, H = num_groups, experts_per_group, hidden_size
    E = G * Kpg
    GH = G * H
    gh_pad = _round_up(GH, LANE)
    e_pad = _round_up(E, LANE)

    w_grp = we.reshape(G, Kpg, D, H).sum(axis=1)                          # [G, D, H]
    w_all = jnp.transpose(w_grp, (1, 0, 2)).reshape(D, GH)                # [D, GH]
    b_all = be.reshape(G, Kpg, H).sum(axis=1).reshape(1, GH)              # [1, GH]

    w_all_p = jnp.zeros((D, gh_pad), jnp.float32).at[:, :GH].set(w_all)
    wg_p = jnp.zeros((D, e_pad), jnp.float32).at[:, :E].set(wg)
    b_all_p = jnp.zeros((1, gh_pad), jnp.float32).at[:, :GH].set(b_all)
    bg_p = jnp.zeros((1, e_pad), jnp.float32).at[:, :E].set(bg)

    # MXU operands may be bf16 on v6e/v7x (f32 accumulate); biases / epilogue stay f32.
    w_fused = jnp.concatenate([w_all_p, wg_p], axis=1).astype(mxu_dtype)  # [D, gh_pad+e_pad]
    b_fused = jnp.concatenate([b_all_p, bg_p], axis=1)                    # [1, gh_pad+e_pad]
    meta = dict(num_experts=E, gh=GH, gh_pad=gh_pad, e_pad=e_pad)
    return w_fused, b_fused, meta


def nested_moe_forward(x, w_fused, b_fused, *, num_experts, gh, gh_pad, e_pad,
                       mxu_dtype=jnp.float32):
    """x: [B, D]; w_fused/b_fused/meta from prepare_fused_params()."""
    B, D = x.shape
    n_pad = gh_pad + e_pad

    # Full batch when small; 128-row tiles otherwise so the "parallel" grid axis has
    # >=2 steps and can shard across v7x's two TensorCores.
    tb = B if B <= 128 else 128
    grid = (pl.cdiv(B, tb),)

    kernel = functools.partial(moe_kernel, gh_pad=gh_pad, e_pad=e_pad,
                               num_experts=num_experts)

    # TODO(synk): for large D*GH configs, stream w_fused over a trailing "arbitrary"
    # reduction axis in <=4-8 MiB tiles and set vmem_limit_bytes explicitly (BlockSpec
    # double-buffers each input) -- required to stay under v7x's 64 MiB VMEM; on v5e/v6e
    # keep weights resident and grow tb instead.
    out_padded = pl.pallas_call(
        kernel,
        out_shape=jax.ShapeDtypeStruct((B, gh_pad), jnp.float32),
        grid=grid,
        in_specs=[
            pl.BlockSpec((tb, D), lambda i: (i, 0)),
            pl.BlockSpec((D, n_pad), lambda i: (0, 0)),
            pl.BlockSpec((1, n_pad), lambda i: (0, 0)),
        ],
        out_specs=pl.BlockSpec((tb, gh_pad), lambda i: (i, 0)),
        compiler_params=pltpu.CompilerParams(
            dimension_semantics=("parallel",)),
    )(x.astype(mxu_dtype), w_fused, b_fused)

    return out_padded[:, :gh]


def reference_forward(x, wg, bg, we, be, *, num_groups, experts_per_group, hidden_size):
    """Pure-JAX reference mirroring the PyTorch module literally."""
    gate = jax.nn.softmax(x @ wg + bg, axis=1)                            # [B, E]
    expert_outs = []
    for g in range(num_groups):
        acc = jnp.zeros((x.shape[0], hidden_size), dtype=jnp.float32)
        for k in range(experts_per_group):
            idx = g * experts_per_group + k
            acc = acc + x @ we[idx] + be[idx]
        expert_outs.append(acc)
    expert_outputs = jnp.concatenate(expert_outs, axis=1)                 # [B, G*H]
    return jnp.sum(gate[:, :, None] * expert_outputs[:, None, :], axis=1)


if __name__ == "__main__":
    # Small shapes consistent with the module.
    B = 8
    input_size = 32
    hidden_size = 32
    num_groups = 2
    experts_per_group = 3
    E = num_groups * experts_per_group

    key = jax.random.PRNGKey(0)
    kx, kgw, kgb, kew, keb = jax.random.split(key, 5)

    x = jax.random.normal(kx, (B, input_size), dtype=jnp.float32)

    # nn.Linear weights are [out, in]; store pre-transposed as [in, out].
    gate_w = jax.random.normal(kgw, (E, input_size), dtype=jnp.float32) * 0.1
    gate_b = jax.random.normal(kgb, (E,), dtype=jnp.float32) * 0.1
    wg = gate_w.T                                   # [D, E]
    bg = gate_b[None, :]                            # [1, E]

    expert_w = jax.random.normal(kew, (E, hidden_size, input_size), dtype=jnp.float32) * 0.1
    expert_b = jax.random.normal(keb, (E, hidden_size), dtype=jnp.float32) * 0.1
    we = jnp.transpose(expert_w, (0, 2, 1))         # [NE, D, H]
    be = expert_b                                   # [NE, H]

    # --- one-time parameter prep (hoisted out of the hot path) ---
    w_fused, b_fused, meta = prepare_fused_params(
        wg, bg, we, be, num_groups=num_groups,
        experts_per_group=experts_per_group, hidden_size=hidden_size)
    w_fused, b_fused = jax.block_until_ready((w_fused, b_fused))

    # --- hot-path forward (jitted; meta values are static Python ints) ---
    fwd = jax.jit(functools.partial(nested_moe_forward, **meta))
    out = jax.block_until_ready(fwd(x, w_fused, b_fused))

    ref = reference_forward(x, wg, bg, we, be,
                            num_groups=num_groups,
                            experts_per_group=experts_per_group,
                            hidden_size=hidden_size)

    assert out.shape == (B, num_groups * hidden_size)
    # f32 MXU operands + exact reciprocal: only the linearity fold reassociates sums,
    # so 1e-4 is comfortably met.  (With mxu_dtype=bfloat16, loosen this tolerance.)
    assert jnp.allclose(out, ref, atol=1e-4, rtol=1e-4), "mismatch vs reference"
    print("KERNEL_OK")
</pallas_src>

<mosaic_0001>
module attributes {stable_mosaic.version = 11 : i64} {
  func.func @moe_kernel(%arg0: i32, %arg1: memref<8x32xf32, #tpu.memory_space<vmem>>, %arg2: memref<32x256xf32, #tpu.memory_space<vmem>>, %arg3: memref<1x256xf32, #tpu.memory_space<vmem>>, %arg4: memref<8x128xf32, #tpu.memory_space<vmem>>) attributes {dimension_semantics = [#tpu.dimension_semantics<parallel>], iteration_bounds = array<i64: 1>, scalar_prefetch = 0 : i64, scratch_operands = 0 : i64, tpu.core_type = #tpu.core_type<tc>, window_params = [{transform_indices = @transform_0, window_bounds = array<i64: 8, 32>}, {pipeline_mode = #tpu.pipeline_mode<synchronous>, transform_indices = @transform_1, window_bounds = array<i64: 32, 256>}, {pipeline_mode = #tpu.pipeline_mode<synchronous>, transform_indices = @transform_2, window_bounds = array<i64: 1, 256>}, {transform_indices = @transform_3, window_bounds = array<i64: 8, 128>}]} {
    %c0 = arith.constant 0 : index
    %c0_0 = arith.constant 0 : index
    %0 = vector.load %arg1[%c0, %c0_0] : memref<8x32xf32, #tpu.memory_space<vmem>>, vector<8x32xf32>
    %c0_1 = arith.constant 0 : index
    %c0_2 = arith.constant 0 : index
    %1 = vector.load %arg2[%c0_1, %c0_2] : memref<32x256xf32, #tpu.memory_space<vmem>>, vector<32x256xf32>
    %cst = arith.constant dense<0.000000e+00> : vector<8x256xf32>
    %2 = tpu.matmul %0, %1, %cst {dimension_numbers = #tpu.dot_dimension_numbers<[1], [0], [0], [1], [0, 0, 1, 1], [], []>} : vector<8x32xf32>, vector<32x256xf32>, vector<8x256xf32> -> vector<8x256xf32>
    %c0_3 = arith.constant 0 : index
    %c0_4 = arith.constant 0 : index
    %3 = vector.load %arg3[%c0_3, %c0_4] : memref<1x256xf32, #tpu.memory_space<vmem>>, vector<1x256xf32>
    %4 = vector.broadcast %3 : vector<1x256xf32> to vector<8x256xf32>
    %5 = arith.addf %2, %4 : vector<8x256xf32>
    %6 = vector.extract_strided_slice %5 {offsets = [0, 0], sizes = [8, 128], strides = [1, 1]} : vector<8x256xf32> to vector<8x128xf32>
    %7 = vector.extract_strided_slice %5 {offsets = [0, 128], sizes = [8, 128], strides = [1, 1]} : vector<8x256xf32> to vector<8x128xf32>
    %8 = tpu.iota {dimensions = array<i32: 1>} : vector<8x128xi32>
    %c6_i32 = arith.constant 6 : i32
    %9 = vector.broadcast %c6_i32 : i32 to vector<8x128xi32>
    %10 = arith.cmpi slt, %8, %9 : vector<8x128xi32>
    %cst_5 = arith.constant -1.000000e+30 : f32
    %11 = vector.broadcast %cst_5 : f32 to vector<8x128xf32>
    %12 = arith.select %10, %7, %11 : vector<8x128xi1>, vector<8x128xf32>
    %cst_6 = arith.constant dense<0xFF800000> : vector<8xf32>
    %13 = vector.multi_reduction <maximumf>, %12, %cst_6 [1] : vector<8x128xf32> to vector<8xf32>
    %14 = vector.shape_cast %13 : vector<8xf32> to vector<8x1xf32>
    %15 = vector.broadcast %14 : vector<8x1xf32> to vector<8x128xf32>
    %16 = arith.subf %12, %15 : vector<8x128xf32>
    %17 = math.exp %16 : vector<8x128xf32>
    %cst_7 = arith.constant dense<0.000000e+00> : vector<8xf32>
    %18 = vector.multi_reduction <add>, %17, %cst_7 [1] : vector<8x128xf32> to vector<8xf32>
    %19 = vector.shape_cast %18 : vector<8xf32> to vector<8x1xf32>
    %20 = tpu.reciprocal %19 : vector<8x1xf32> -> vector<8x1xf32>
    %21 = arith.mulf %19, %20 : vector<8x1xf32>
    %22 = vector.broadcast %21 : vector<8x1xf32> to vector<8x128xf32>
    %23 = arith.mulf %22, %6 : vector<8x128xf32>
    %c0_8 = arith.constant 0 : index
    %c0_9 = arith.constant 0 : index
    %24 = vector.load %arg4[%c0_8, %c0_9] : memref<8x128xf32, #tpu.memory_space<vmem>>, vector<8x128xf32>
    tpu.vector_store %arg4[%c0_8, %c0_9], %23 {strides = array<i32>} : memref<8x128xf32, #tpu.memory_space<vmem>>, vector<8x128xf32>,
    return
  }
  func.func @transform_0(%arg0: i32) -> (i32, i32) {
    %c0_i32 = arith.constant 0 : i32
    %c0_i32_0 = arith.constant 0 : i32
    return %arg0, %c0_i32 : i32, i32
  }
  func.func @transform_1(%arg0: i32) -> (i32, i32) {
    %c0_i32 = arith.constant 0 : i32
    %c0_i32_0 = arith.constant 0 : i32
    %c0_i32_1 = arith.constant 0 : i32
    return %c0_i32, %c0_i32_0 : i32, i32
  }
  func.func @transform_2(%arg0: i32) -> (i32, i32) {
    %c0_i32 = arith.constant 0 : i32
    %c0_i32_0 = arith.constant 0 : i32
    %c0_i32_1 = arith.constant 0 : i32
    return %c0_i32, %c0_i32_0 : i32, i32
  }
  func.func @transform_3(%arg0: i32) -> (i32, i32) {
    %c0_i32 = arith.constant 0 : i32
    %c0_i32_0 = arith.constant 0 : i32
    return %arg0, %c0_i32 : i32, i32
  }
}

</mosaic_0001>

<llo_original>
// kernel: nested_moe_forward.1
$region0: #{nested_moe_forward.1}
  #allocation0 [shape = 'u32[]', space=smem, size = 0x4, offset = 0x4, fixed_abs, tag = 'smem constant byte address 0x4 - core index']
  #allocation1 [shape = 'u32[72,128]{1,0:T(1,128)}', space=vmem, size = 0x9000, scoped, tag = 'internal scratch']
  %s0 = inlined_call_operand.hbm [shape: f32[8,32], index: 0, kind: input, shape index: {}]
  %s1 = inlined_call_operand.hbm [shape: f32[32,256], index: 1, kind: input, shape index: {}]
  %s2 = inlined_call_operand.hbm [shape: f32[1,256], index: 2, kind: input, shape index: {}]
  %s3 = inlined_call_operand.hbm [shape: f32[8,128], index: 3, kind: output, shape index: {}]
  %s4 = sld [smem:[#allocation0]]
  $region34: #{nested_moe_forward.1} parent=0
    _
  %s6 = ssub.s32 1, %s4
  %s7 = scalar_select 0, %s6, %s4
  $region1: #{nested_moe_forward.1} parent=0
    #allocation2 [shape = 'u8[4096]{0}', space=vmem, size = 0x1000, scoped, tag = 'input window, operand 0, single buffered']
    #allocation3 [shape = 's32[1]{0}', space=sflag, size = 0x4, scoped, tag = 'scoped memory for nested_moe_forward.1']
    #allocation4 [shape = 's32[1]{0}', space=sflag, size = 0x4, scoped, tag = 'scoped memory for nested_moe_forward.1']
    #allocation5 [shape = 'u8[32768]{0}', space=vmem, size = 0x8000, scoped, tag = 'input window, operand 1, single buffered']
    #allocation6 [shape = 's32[1]{0}', space=sflag, size = 0x4, scoped, tag = 'scoped memory for nested_moe_forward.1']
    #allocation7 [shape = 'u8[1024]{0}', space=vmem, size = 0x400, scoped, tag = 'input window, operand 2, single buffered']
    #allocation8 [shape = 'u8[4096]{0}', space=vmem, size = 0x1000, scoped, tag = 'output window, operand 0, single buffered']
    %8 = vsyncpa [#allocation3], 0
    %9 = vsyncpa [#allocation6], 0
    %10 = vsyncpa [#allocation4], 0
    // Predicated region
    $region2: #{nested_moe_forward.1} parent=1 // pred_check
      _
    $region3: #{nested_moe_forward.1} parent=1 // pred_check_branch
      %12 = sbr.rel (0) target = $region5
    $region4: #{nested_moe_forward.1} parent=1 // pred_region
      %14 = vsyncadd [#allocation3], 0
      %s16 = sshll.u32 %s0, 4
      %s17 = int_to_ptr.hbm [resolvable:$true] %s16
      %s18 = sshll.u32 [#allocation2], 4
      %s19 = int_to_ptr.vmem [resolvable:$true] %s18
      %21 = dma.hbm_to_vmem [thread:$0]  %s17, 128, %s19, [#allocation3]
    $region5: #{nested_moe_forward.1} parent=1 // pred_fallthru
      _
    // Predicated region
    $region6: #{nested_moe_forward.1} parent=1 // pred_check
      _
    $region7: #{nested_moe_forward.1} parent=1 // pred_check_branch
      %23 = sbr.rel (0) target = $region9
    $region8: #{nested_moe_forward.1} parent=1 // pred_region
      %25 = vsyncadd [#allocation6], 0
      %s26 = sshll.u32 %s1, 4
      %s27 = int_to_ptr.hbm [resolvable:$true] %s26
      %s28 = sshll.u32 [#allocation5], 4
      %s29 = int_to_ptr.vmem [resolvable:$true] %s28
      %34 = dma.hbm_to_vmem [thread:$0]  %s27, 1024, %s29, [#allocation6], 256, 256, 16
    $region9: #{nested_moe_forward.1} parent=1 // pred_fallthru
      _
    // Predicated region
    $region10: #{nested_moe_forward.1} parent=1 // pred_check
      _
    $region11: #{nested_moe_forward.1} parent=1 // pred_check_branch
      %36 = sbr.rel (0) target = $region13
    $region12: #{nested_moe_forward.1} parent=1 // pred_region
      %38 = vsyncadd [#allocation6], 0
      %s40 = sshll.u32 %s2, 4
      %s41 = int_to_ptr.hbm [resolvable:$true] %s40
      %s42 = sshll.u32 [#allocation7], 4
      %s43 = int_to_ptr.vmem [resolvable:$true] %s42
      %45 = dma.hbm_to_vmem [thread:$0]  %s41, 32, %s43, [#allocation6]
    $region13: #{nested_moe_forward.1} parent=1 // pred_fallthru
      _
    // Predicated region
    $region14: #{nested_moe_forward.1} parent=1 // pred_check
      _
    $region15: #{nested_moe_forward.1} parent=1 // pred_check_branch
      %47 = sbr.rel (0) target = $region17
    $region16: #{nested_moe_forward.1} parent=1 // pred_region
      %49 = dma.done [#allocation3], 128
    $region17: #{nested_moe_forward.1} parent=1 // pred_fallthru
      _
    // Predicated region
    $region18: #{nested_moe_forward.1} parent=1 // pred_check
      _
    $region19: #{nested_moe_forward.1} parent=1 // pred_check_branch
      %51 = sbr.rel (0) target = $region21
    $region20: #{nested_moe_forward.1} parent=1 // pred_region
      %53 = dma.done [#allocation6], 1024
    $region21: #{nested_moe_forward.1} parent=1 // pred_fallthru
      _
    // Predicated region
    $region22: #{nested_moe_forward.1} parent=1 // pred_check
      _
    $region23: #{nested_moe_forward.1} parent=1 // pred_check_branch
      %55 = sbr.rel (0) target = $region25
    $region24: #{nested_moe_forward.1} parent=1 // pred_region
      %57 = dma.done [#allocation6], 32
    $region25: #{nested_moe_forward.1} parent=1 // pred_fallthru
      _
    %v58 = vld [vmem:[#allocation2] sm:$0xff]
    %v59 = vld [vmem:[#allocation5] sm:$0xff]
    %v60 = vld [vmem:[#allocation5 + $0x8] sm:$0xff]
    %v61 = vld [vmem:[#allocation5 + $0x10] sm:$0xff]
    %v62 = vld [vmem:[#allocation5 + $0x18] sm:$0xff]
    %v63 = vld [vmem:[#allocation5 + $0x20] sm:$0xff]
    %v64 = vld [vmem:[#allocation5 + $0x28] sm:$0xff]
    %v65 = vld [vmem:[#allocation5 + $0x30] sm:$0xff]
    %v66 = vld [vmem:[#allocation5 + $0x38] sm:$0xff]
    %v67 = vld [vmem:[#allocation7] sm:$0x3]
    %v69 = vperm.slane %v67, 0
    %v70 = vperm.slane %v67, 1
    %vm73 = vcmask 261120
    %v75 = vsel %vm73, %v58, 0
    %77 = vmatpush.msra.mxu0 0.0
    %78 = vmatpush.msra.mxu0 0.0
    %79 = vmatpush.msra.mxu0 0.0
    %80 = vmatpush.msra.mxu0 0.0
    %81 = vmatpush.msra.mxu0 0.0
    %82 = vmatpush.msra.mxu0 0.0
    %83 = vmatpush.msra.mxu0 0.0
    %84 = vmatpush.msra.mxu0 0.0
    %85 = vmatpush.msra.mxu0 0.0
    %86 = vmatpush.msra.mxu0 0.0
    %87 = vmatpush.msra.mxu0 0.0
    %88 = vmatpush.msra.mxu0 0.0
    %89 = vmatpush.msra.mxu0 %v65
    %90 = vmatpush.msra.mxu0 %v63
    %91 = vmatpush.msra.mxu0 %v61
    %92 = vmatpush.msra.mxu0 %v59
    %93 = vmatmul.f32.gmra.mxu0 %v75
    %v94 = vpop.f32.mrf.mxu0
    %v95 = vadd.f32 %v69, %v94
    %96 = vdwg.mxu0
    %97 = vmatpush.msra.mxu0 0.0
    %98 = vmatpush.msra.mxu0 0.0
    %99 = vmatpush.msra.mxu0 0.0
    %100 = vmatpush.msra.mxu0 0.0
    %101 = vmatpush.msra.mxu0 0.0
    %102 = vmatpush.msra.mxu0 0.0
    %103 = vmatpush.msra.mxu0 0.0
    %104 = vmatpush.msra.mxu0 0.0
    %105 = vmatpush.msra.mxu0 0.0
    %106 = vmatpush.msra.mxu0 0.0
    %107 = vmatpush.msra.mxu0 0.0
    %108 = vmatpush.msra.mxu0 0.0
    %109 = vmatpush.msra.mxu0 %v66
    %110 = vmatpush.msra.mxu0 %v64
    %111 = vmatpush.msra.mxu0 %v62
    %112 = vmatpush.msra.mxu0 %v60
    %113 = vmatmul.f32.gmra.mxu0 %v75
    %v114 = vpop.f32.mrf.mxu0
    %v115 = vadd.f32 %v70, %v114
    %116 = vdwg.mxu0
    %v117 = vlaneseq
    %v118 = vand.u32 %v117, 127
    %vm119 = vcmp.lt.s32.totalorder %v118, 6
    %v120 = vsel %vm119, %v115, -1e+30
    %121 = vmax.xlane.f32.xlu0 %v120
    %v122 = vpop.xlane.xlu0 %121
    %v123 = vsub.f32 %v120, %v122
    %v124 = vmul.f32 %v123, 1.442695
    %v125 = vpow.pop %v124
    %126 = vadd.xlane.f32.xlu0 %v125
    %v127 = vpop.xlane.xlu0 %126
    %v128 = vrcp.pop %v127
    %v129 = vmul.f32 %v127, %v128
    %v130 = vsub.f32 1.0, %v129
    %v131 = vmul.f32 %v128, %v130
    %v132 = vadd.f32 %v128, %v131
    %vm133 = vweird.f32 %v127
    %vm134 = vweird.f32 %v128
    %vm135 = vmor %vm133, %vm134
    %v136 = vsel %vm135, %v128, %v132
    %v137 = vand.u32 2147483647, %v127
    %vm138 = vcmp.eq.f32.partialorder %v137, 8.507059e+37
    %v139 = vand.u32 %v127, 2147483648
    %v140 = vor.u32 1.1754944e-38, %v139
    %v141 = vsel %vm138, %v140, %v136
    %v142 = vmul.f32 %v127, %v141
    %v143 = vmul.f32 %v142, %v95
    %144 = vst [vmem:[#allocation8] sm:$0xff] %v143
    // Predicated region
    $region26: #{nested_moe_forward.1} parent=1 // pred_check
      _
    $region27: #{nested_moe_forward.1} parent=1 // pred_check_branch
      %146 = sbr.rel (0) target = $region29
    $region28: #{nested_moe_forward.1} parent=1 // pred_region
      %148 = vsyncadd [#allocation4], 0
      %s150 = sshll.u32 [#allocation8], 4
      %s151 = int_to_ptr.vmem [resolvable:$true] %s150
      %s152 = sshll.u32 %s3, 4
      %s153 = int_to_ptr.hbm [resolvable:$true] %s152
      %155 = dma.vmem_to_hbm [thread:$0]  %s151, 128, %s153, [#allocation4]
    $region29: #{nested_moe_forward.1} parent=1 // pred_fallthru
      _
    // Predicated region
    $region30: #{nested_moe_forward.1} parent=1 // pred_check
      _
    $region31: #{nested_moe_forward.1} parent=1 // pred_check_branch
      %157 = sbr.rel (0) target = $region33
    $region32: #{nested_moe_forward.1} parent=1 // pred_region
      %159 = dma.done [#allocation4], 128
    $region33: #{nested_moe_forward.1} parent=1 // pred_fallthru
      _
    %160 = vsyncpa [#allocation3], 1
    %161 = vsyncpa [#allocation6], 1
    %162 = vsyncpa [#allocation4], 1

</llo_original>
